<compile_context>
chip_gen: v7x
topology: tpu7x:2x2x1
jax: 0.10.0
libtpu: 0.0.40
codegen_flags: <defaults>
</compile_context>

<pallas_src>
import jax
import jax.numpy as jnp
from jax.experimental import pallas as pl
from jax.experimental.pallas import tpu as pltpu

BN_EPS = 1e-5
LANE = 128
SUBLANE = 8


def _round_up(x, m):
    return (x + m - 1) // m * m


def ann_kernel(x_ref,
               w1_ref, b1_ref,
               w2_ref, b2_ref,
               w3_ref, b3_ref,
               wh_ref, bh_ref,
               out_ref):
    # fc1 (+ folded bn1) -> relu   (biases / ReLU in f32; v5e VPU has no bf16)
    h1 = jnp.dot(x_ref[...].astype(w1_ref.dtype), w1_ref[...],
                 preferred_element_type=jnp.float32) + b1_ref[...]
    h1 = jnp.maximum(h1, 0.0)

    # fc2 (+ folded bn2) -> relu
    h2 = jnp.dot(h1.astype(w2_ref.dtype), w2_ref[...],
                 preferred_element_type=jnp.float32) + b2_ref[...]
    h2 = jnp.maximum(h2, 0.0)

    # dropout(p=0.3): identity in inference mode
    # TODO(synk): training-mode dropout (stochastic mask via pltpu.prng_*) not emitted.

    # fc3 -> relu
    h3 = jnp.dot(h2.astype(w3_ref.dtype), w3_ref[...],
                 preferred_element_type=jnp.float32) + b3_ref[...]
    h3 = jnp.maximum(h3, 0.0)

    # fused heads [class | state | zero pad] -> single lane-dense 128-wide store
    out = jnp.dot(h3.astype(wh_ref.dtype), wh_ref[...],
                  preferred_element_type=jnp.float32) + bh_ref[...]
    out_ref[...] = out.astype(out_ref.dtype)


def fold_params(p, weight_dtype=jnp.bfloat16):
    """One-time host-side fold: BN into fc1/fc2, heads fused + zero-padded to 128."""
    s1 = p["g1"] * jax.lax.rsqrt(p["v1"] + BN_EPS)          # [1, 128]
    w1 = p["w1"] * s1
    b1 = (p["b1"] - p["m1"]) * s1 + p["be1"]

    s2 = p["g2"] * jax.lax.rsqrt(p["v2"] + BN_EPS)          # [1, 256]
    w2 = p["w2"] * s2
    b2 = (p["b2"] - p["m2"]) * s2 + p["be2"]

    num_class = p["wc"].shape[1]
    num_state = p["ws"].shape[1]
    head = num_class + num_state
    head_pad = _round_up(head, LANE)

    wh = jnp.zeros((p["wc"].shape[0], head_pad), jnp.float32)
    wh = wh.at[:, :num_class].set(p["wc"]).at[:, num_class:head].set(p["ws"])
    bh = jnp.zeros((1, head_pad), jnp.float32)
    bh = bh.at[:, :num_class].set(p["bc"]).at[:, num_class:head].set(p["bs"])

    return dict(
        w1=w1.astype(weight_dtype), b1=b1.astype(jnp.float32),
        w2=w2.astype(weight_dtype), b2=b2.astype(jnp.float32),
        w3=p["w3"].astype(weight_dtype), b3=p["b3"].astype(jnp.float32),
        wh=wh.astype(weight_dtype), bh=bh.astype(jnp.float32),
        num_class=num_class, num_state=num_state,
    )


def ann_forward(x, fused, *, tile_b=1024, out_dtype=None):
    B, in_dim = x.shape
    num_class = fused["num_class"]
    num_state = fused["num_state"]
    head_pad = fused["wh"].shape[1]

    if out_dtype is None:
        # bf16 output by default when running the bf16 weight path: the output
        # is the dominant HBM stream (113/128 lanes are zero pad anyway).
        out_dtype = (jnp.bfloat16 if fused["w1"].dtype == jnp.bfloat16
                     else jnp.float32)

    # Batch tile: multiple of 8 (sublane), no bigger than the rounded batch.
    tile_b = max(SUBLANE, _round_up(min(tile_b, _round_up(B, SUBLANE)), SUBLANE))
    # Keep grid >= 2 when the batch allows it so the "parallel" axis feeds both
    # v7x TensorCores; one extra grid step is noise on single-TC v5e/v6e.
    if B >= 2 * SUBLANE:
        tile_b = min(tile_b, _round_up(pl.cdiv(B, 2), SUBLANE))
    grid = (pl.cdiv(B, tile_b),)

    param_order = ["w1", "b1", "w2", "b2", "w3", "b3", "wh", "bh"]
    param_arrays = [fused[k] for k in param_order]
    # Every parameter is a single full-array block, resident across the grid.
    param_specs = [pl.BlockSpec(fused[k].shape, lambda i: (0, 0))
                   for k in param_order]

    b_eff = grid[0] * tile_b
    flops = 2 * b_eff * (in_dim * 128 + 128 * 256 + 256 * 128 + 128 * head_pad)
    bytes_accessed = (sum(int(a.size) * a.dtype.itemsize for a in param_arrays)
                      + int(x.size) * x.dtype.itemsize
                      + B * head_pad * jnp.dtype(out_dtype).itemsize)

    # No wrapper-side padding of x: the final (possibly ragged) block is read
    # padded and written clipped by Pallas; all ops are row-independent.
    out = pl.pallas_call(
        ann_kernel,
        out_shape=jax.ShapeDtypeStruct((B, head_pad), out_dtype),
        grid_spec=pltpu.PrefetchScalarGridSpec(
            num_scalar_prefetch=0,
            grid=grid,
            in_specs=[pl.BlockSpec((tile_b, in_dim), lambda i: (i, 0))]
                     + param_specs,
            out_specs=pl.BlockSpec((tile_b, head_pad), lambda i: (i, 0)),
        ),
        compiler_params=pltpu.CompilerParams(
            dimension_semantics=("parallel",)),
        cost_estimate=pl.CostEstimate(
            flops=int(flops), transcendentals=0,
            bytes_accessed=int(bytes_accessed)),
    )(x, *param_arrays)

    # NOTE: rows are exact (no batch padding in HBM); lanes [head:128) of the
    # padded output block are zero-weight logits and must not be consumed.
    class_out = out[:, :num_class]
    state_out = out[:, num_class:num_class + num_state]
    return class_out, state_out


def make_params(key, input_size, num_class, num_state):
    ks = jax.random.split(key, 16)

    def lin(kw, kb, fan_in, fan_out):
        bound = 1.0 / jnp.sqrt(fan_in)
        w = jax.random.uniform(kw, (fan_in, fan_out), jnp.float32, -bound, bound)
        b = jax.random.uniform(kb, (1, fan_out), jnp.float32, -bound, bound)
        return w, b

    w1, b1 = lin(ks[0], ks[1], input_size, 128)
    w2, b2 = lin(ks[2], ks[3], 128, 256)
    w3, b3 = lin(ks[4], ks[5], 256, 128)
    wc, bc = lin(ks[6], ks[7], 128, num_class)
    ws, bs = lin(ks[8], ks[9], 128, num_state)

    # BatchNorm affine params + running stats (deterministic, non-trivial)
    g1 = 1.0 + 0.1 * jax.random.normal(ks[10], (1, 128), jnp.float32)
    be1 = 0.1 * jax.random.normal(ks[11], (1, 128), jnp.float32)
    m1 = 0.05 * jax.random.normal(ks[12], (1, 128), jnp.float32)
    v1 = 1.0 + 0.1 * jax.random.uniform(ks[13], (1, 128), jnp.float32)

    g2 = 1.0 + 0.1 * jax.random.normal(ks[14], (1, 256), jnp.float32)
    be2 = 0.1 * jax.random.normal(ks[15], (1, 256), jnp.float32)
    m2 = jnp.linspace(-0.05, 0.05, 256, dtype=jnp.float32).reshape(1, 256)
    v2 = jnp.linspace(0.9, 1.1, 256, dtype=jnp.float32).reshape(1, 256)

    return dict(w1=w1, b1=b1, g1=g1, be1=be1, m1=m1, v1=v1,
                w2=w2, b2=b2, g2=g2, be2=be2, m2=m2, v2=v2,
                w3=w3, b3=b3, wc=wc, bc=bc, ws=ws, bs=bs)


def ann_reference(x, p):
    h1 = x @ p["w1"] + p["b1"]
    h1 = (h1 - p["m1"]) / jnp.sqrt(p["v1"] + BN_EPS) * p["g1"] + p["be1"]
    h1 = jnp.maximum(h1, 0.0)
    h2 = h1 @ p["w2"] + p["b2"]
    h2 = (h2 - p["m2"]) / jnp.sqrt(p["v2"] + BN_EPS) * p["g2"] + p["be2"]
    h2 = jnp.maximum(h2, 0.0)
    h3 = jnp.maximum(h2 @ p["w3"] + p["b3"], 0.0)
    return h3 @ p["wc"] + p["bc"], h3 @ p["ws"] + p["bs"]


if __name__ == "__main__":
    input_size, num_class, num_state = 32, 10, 5

    key = jax.random.PRNGKey(0)
    kx, kp, kx2 = jax.random.split(key, 3)
    params = make_params(kp, input_size, num_class, num_state)

    # --- small batch, not a multiple of 8: exercises the ragged final block ---
    B = 12
    x = jax.random.normal(kx, (B, input_size), jnp.float32)
    ref_c, ref_s = ann_reference(x, params)

    # f32 path (exactness check vs. unfused reference)
    fused_f32 = fold_params(params, weight_dtype=jnp.float32)
    class_out, state_out = ann_forward(x, fused_f32, out_dtype=jnp.float32)
    class_out = jax.block_until_ready(class_out)
    state_out = jax.block_until_ready(state_out)
    assert class_out.shape == (B, num_class) and state_out.shape == (B, num_state)
    assert jnp.allclose(class_out, ref_c, atol=1e-4, rtol=1e-4)
    assert jnp.allclose(state_out, ref_s, atol=1e-4, rtol=1e-4)

    # Default path: bf16 weights/operands + bf16 output (f32 accumulation).
    # NOTE: activations are also cast to bf16 before each matmul, hence the
    # looser tolerance vs. the f32 reference — acceptable for inference.
    fused_bf16 = fold_params(params)
    class_bf, state_bf = ann_forward(x, fused_bf16)
    class_bf = jax.block_until_ready(class_bf).astype(jnp.float32)
    state_bf = jax.block_until_ready(state_bf).astype(jnp.float32)
    assert jnp.allclose(class_bf, ref_c, atol=0.25, rtol=0.1)
    assert jnp.allclose(state_bf, ref_s, atol=0.25, rtol=0.1)

    # --- larger batch: exercises grid >= 2 (both v7x cores) + ragged block ---
    B2 = 300
    x2 = jax.random.normal(kx2, (B2, input_size), jnp.float32)
    ref_c2, ref_s2 = ann_reference(x2, params)
    class2, state2 = ann_forward(x2, fused_f32, out_dtype=jnp.float32)
    class2 = jax.block_until_ready(class2)
    state2 = jax.block_until_ready(state2)
    assert class2.shape == (B2, num_class) and state2.shape == (B2, num_state)
    assert jnp.allclose(class2, ref_c2, atol=1e-4, rtol=1e-4)
    assert jnp.allclose(state2, ref_s2, atol=1e-4, rtol=1e-4)

    print("KERNEL_OK")
</pallas_src>

<mosaic_0001>
module attributes {stable_mosaic.version = 11 : i64} {
  func.func @ann_kernel(%arg0: i32, %arg1: memref<16x32xf32, #tpu.memory_space<vmem>>, %arg2: memref<32x128xf32, #tpu.memory_space<vmem>>, %arg3: memref<1x128xf32, #tpu.memory_space<vmem>>, %arg4: memref<128x256xf32, #tpu.memory_space<vmem>>, %arg5: memref<1x256xf32, #tpu.memory_space<vmem>>, %arg6: memref<256x128xf32, #tpu.memory_space<vmem>>, %arg7: memref<1x128xf32, #tpu.memory_space<vmem>>, %arg8: memref<128x128xf32, #tpu.memory_space<vmem>>, %arg9: memref<1x128xf32, #tpu.memory_space<vmem>>, %arg10: memref<16x128xf32, #tpu.memory_space<vmem>>) attributes {dimension_semantics = [#tpu.dimension_semantics<parallel>], iteration_bounds = array<i64: 1>, scalar_prefetch = 0 : i64, scratch_operands = 0 : i64, tpu.core_type = #tpu.core_type<tc>, window_params = [{transform_indices = @transform_0, window_bounds = array<i64: 16, 32>}, {pipeline_mode = #tpu.pipeline_mode<synchronous>, transform_indices = @transform_1, window_bounds = array<i64: 32, 128>}, {pipeline_mode = #tpu.pipeline_mode<synchronous>, transform_indices = @transform_2, window_bounds = array<i64: 1, 128>}, {pipeline_mode = #tpu.pipeline_mode<synchronous>, transform_indices = @transform_3, window_bounds = array<i64: 128, 256>}, {pipeline_mode = #tpu.pipeline_mode<synchronous>, transform_indices = @transform_4, window_bounds = array<i64: 1, 256>}, {pipeline_mode = #tpu.pipeline_mode<synchronous>, transform_indices = @transform_5, window_bounds = array<i64: 256, 128>}, {pipeline_mode = #tpu.pipeline_mode<synchronous>, transform_indices = @transform_6, window_bounds = array<i64: 1, 128>}, {pipeline_mode = #tpu.pipeline_mode<synchronous>, transform_indices = @transform_7, window_bounds = array<i64: 128, 128>}, {pipeline_mode = #tpu.pipeline_mode<synchronous>, transform_indices = @transform_8, window_bounds = array<i64: 1, 128>}, {transform_indices = @transform_9, window_bounds = array<i64: 16, 128>}]} {
    %c0 = arith.constant 0 : index
    %c0_0 = arith.constant 0 : index
    %0 = vector.load %arg1[%c0, %c0_0] : memref<16x32xf32, #tpu.memory_space<vmem>>, vector<16x32xf32>
    %c0_1 = arith.constant 0 : index
    %c0_2 = arith.constant 0 : index
    %1 = vector.load %arg2[%c0_1, %c0_2] : memref<32x128xf32, #tpu.memory_space<vmem>>, vector<32x128xf32>
    %cst = arith.constant dense<0.000000e+00> : vector<16x128xf32>
    %2 = tpu.matmul %0, %1, %cst {dimension_numbers = #tpu.dot_dimension_numbers<[1], [0], [0], [1], [0, 0, 1, 1], [], []>} : vector<16x32xf32>, vector<32x128xf32>, vector<16x128xf32> -> vector<16x128xf32>
    %c0_3 = arith.constant 0 : index
    %c0_4 = arith.constant 0 : index
    %3 = vector.load %arg3[%c0_3, %c0_4] : memref<1x128xf32, #tpu.memory_space<vmem>>, vector<1x128xf32>
    %4 = vector.broadcast %3 : vector<1x128xf32> to vector<16x128xf32>
    %5 = arith.addf %2, %4 : vector<16x128xf32>
    %cst_5 = arith.constant 0.000000e+00 : f32
    %6 = vector.broadcast %cst_5 : f32 to vector<16x128xf32>
    %7 = arith.maximumf %5, %6 : vector<16x128xf32>
    %c0_6 = arith.constant 0 : index
    %c0_7 = arith.constant 0 : index
    %8 = vector.load %arg4[%c0_6, %c0_7] : memref<128x256xf32, #tpu.memory_space<vmem>>, vector<128x256xf32>
    %cst_8 = arith.constant dense<0.000000e+00> : vector<16x256xf32>
    %9 = tpu.matmul %7, %8, %cst_8 {dimension_numbers = #tpu.dot_dimension_numbers<[1], [0], [0], [1], [0, 0, 1, 1], [], []>} : vector<16x128xf32>, vector<128x256xf32>, vector<16x256xf32> -> vector<16x256xf32>
    %c0_9 = arith.constant 0 : index
    %c0_10 = arith.constant 0 : index
    %10 = vector.load %arg5[%c0_9, %c0_10] : memref<1x256xf32, #tpu.memory_space<vmem>>, vector<1x256xf32>
    %11 = vector.broadcast %10 : vector<1x256xf32> to vector<16x256xf32>
    %12 = arith.addf %9, %11 : vector<16x256xf32>
    %cst_11 = arith.constant 0.000000e+00 : f32
    %13 = vector.broadcast %cst_11 : f32 to vector<16x256xf32>
    %14 = arith.maximumf %12, %13 : vector<16x256xf32>
    %c0_12 = arith.constant 0 : index
    %c0_13 = arith.constant 0 : index
    %15 = vector.load %arg6[%c0_12, %c0_13] : memref<256x128xf32, #tpu.memory_space<vmem>>, vector<256x128xf32>
    %cst_14 = arith.constant dense<0.000000e+00> : vector<16x128xf32>
    %16 = tpu.matmul %14, %15, %cst_14 {dimension_numbers = #tpu.dot_dimension_numbers<[1], [0], [0], [1], [0, 0, 1, 1], [], []>} : vector<16x256xf32>, vector<256x128xf32>, vector<16x128xf32> -> vector<16x128xf32>
    %c0_15 = arith.constant 0 : index
    %c0_16 = arith.constant 0 : index
    %17 = vector.load %arg7[%c0_15, %c0_16] : memref<1x128xf32, #tpu.memory_space<vmem>>, vector<1x128xf32>
    %18 = vector.broadcast %17 : vector<1x128xf32> to vector<16x128xf32>
    %19 = arith.addf %16, %18 : vector<16x128xf32>
    %cst_17 = arith.constant 0.000000e+00 : f32
    %20 = vector.broadcast %cst_17 : f32 to vector<16x128xf32>
    %21 = arith.maximumf %19, %20 : vector<16x128xf32>
    %c0_18 = arith.constant 0 : index
    %c0_19 = arith.constant 0 : index
    %22 = vector.load %arg8[%c0_18, %c0_19] : memref<128x128xf32, #tpu.memory_space<vmem>>, vector<128x128xf32>
    %cst_20 = arith.constant dense<0.000000e+00> : vector<16x128xf32>
    %23 = tpu.matmul %21, %22, %cst_20 {dimension_numbers = #tpu.dot_dimension_numbers<[1], [0], [0], [1], [0, 0, 1, 1], [], []>} : vector<16x128xf32>, vector<128x128xf32>, vector<16x128xf32> -> vector<16x128xf32>
    %c0_21 = arith.constant 0 : index
    %c0_22 = arith.constant 0 : index
    %24 = vector.load %arg9[%c0_21, %c0_22] : memref<1x128xf32, #tpu.memory_space<vmem>>, vector<1x128xf32>
    %25 = vector.broadcast %24 : vector<1x128xf32> to vector<16x128xf32>
    %26 = arith.addf %23, %25 : vector<16x128xf32>
    %c0_23 = arith.constant 0 : index
    %c0_24 = arith.constant 0 : index
    %27 = vector.load %arg10[%c0_23, %c0_24] : memref<16x128xf32, #tpu.memory_space<vmem>>, vector<16x128xf32>
    tpu.vector_store %arg10[%c0_23, %c0_24], %26 {strides = array<i32>} : memref<16x128xf32, #tpu.memory_space<vmem>>, vector<16x128xf32>,
    return
  }
  func.func @transform_0(%arg0: i32) -> (i32, i32) {
    %c0_i32 = arith.constant 0 : i32
    %c0_i32_0 = arith.constant 0 : i32
    return %arg0, %c0_i32 : i32, i32
  }
  func.func @transform_1(%arg0: i32) -> (i32, i32) {
    %c0_i32 = arith.constant 0 : i32
    %c0_i32_0 = arith.constant 0 : i32
    %c0_i32_1 = arith.constant 0 : i32
    return %c0_i32, %c0_i32_0 : i32, i32
  }
  func.func @transform_2(%arg0: i32) -> (i32, i32) {
    %c0_i32 = arith.constant 0 : i32
    %c0_i32_0 = arith.constant 0 : i32
    %c0_i32_1 = arith.constant 0 : i32
    return %c0_i32, %c0_i32_0 : i32, i32
  }
  func.func @transform_3(%arg0: i32) -> (i32, i32) {
    %c0_i32 = arith.constant 0 : i32
    %c0_i32_0 = arith.constant 0 : i32
    %c0_i32_1 = arith.constant 0 : i32
    return %c0_i32, %c0_i32_0 : i32, i32
  }
  func.func @transform_4(%arg0: i32) -> (i32, i32) {
    %c0_i32 = arith.constant 0 : i32
    %c0_i32_0 = arith.constant 0 : i32
    %c0_i32_1 = arith.constant 0 : i32
    return %c0_i32, %c0_i32_0 : i32, i32
  }
  func.func @transform_5(%arg0: i32) -> (i32, i32) {
    %c0_i32 = arith.constant 0 : i32
    %c0_i32_0 = arith.constant 0 : i32
    %c0_i32_1 = arith.constant 0 : i32
    return %c0_i32, %c0_i32_0 : i32, i32
  }
  func.func @transform_6(%arg0: i32) -> (i32, i32) {
    %c0_i32 = arith.constant 0 : i32
    %c0_i32_0 = arith.constant 0 : i32
    %c0_i32_1 = arith.constant 0 : i32
    return %c0_i32, %c0_i32_0 : i32, i32
  }
  func.func @transform_7(%arg0: i32) -> (i32, i32) {
    %c0_i32 = arith.constant 0 : i32
    %c0_i32_0 = arith.constant 0 : i32
    %c0_i32_1 = arith.constant 0 : i32
    return %c0_i32, %c0_i32_0 : i32, i32
  }
  func.func @transform_8(%arg0: i32) -> (i32, i32) {
    %c0_i32 = arith.constant 0 : i32
    %c0_i32_0 = arith.constant 0 : i32
    %c0_i32_1 = arith.constant 0 : i32
    return %c0_i32, %c0_i32_0 : i32, i32
  }
  func.func @transform_9(%arg0: i32) -> (i32, i32) {
    %c0_i32 = arith.constant 0 : i32
    %c0_i32_0 = arith.constant 0 : i32
    return %arg0, %c0_i32 : i32, i32
  }
}

</mosaic_0001>

<llo_original>
// kernel: tpu_custom_call.1
$region0: #{tpu_custom_call.1}
  #allocation0 [shape = 'u32[]', space=smem, size = 0x4, offset = 0x4, fixed_abs, tag = 'smem constant byte address 0x4 - core index']
  #allocation1 [shape = 'u32[144,128]{1,0:T(1,128)}', space=vmem, size = 0x12000, scoped, tag = 'internal scratch']
  %s0 = inlined_call_operand.hbm [shape: f32[12,32], index: 0, kind: input, shape index: {}]
  %s1 = inlined_call_operand.hbm [shape: f32[32,128], index: 1, kind: input, shape index: {}]
  %s2 = inlined_call_operand.vmem [shape: f32[1,128], index: 2, kind: input, shape index: {}]
  %s3 = inlined_call_operand.hbm [shape: f32[128,256], index: 3, kind: input, shape index: {}]
  %s4 = inlined_call_operand.vmem [shape: f32[1,256], index: 4, kind: input, shape index: {}]
  %s5 = inlined_call_operand.hbm [shape: f32[256,128], index: 5, kind: input, shape index: {}]
  %s6 = inlined_call_operand.vmem [shape: f32[1,128], index: 6, kind: input, shape index: {}]
  %s7 = inlined_call_operand.hbm [shape: f32[128,128], index: 7, kind: input, shape index: {}]
  %s8 = inlined_call_operand.vmem [shape: f32[1,128], index: 8, kind: input, shape index: {}]
  %s9 = inlined_call_operand.hbm [shape: f32[12,128], index: 9, kind: output, shape index: {}]
  %s10 = sld [smem:[#allocation0]]
  $region66: #{tpu_custom_call.1} parent=0
    _
  %s12 = ssub.s32 1, %s10
  %s13 = scalar_select 0, %s12, %s10
  $region1: #{tpu_custom_call.1} parent=0
    #allocation2 [shape = 'u8[8192]{0}', space=vmem, size = 0x2000, scoped, tag = 'input window, operand 0, single buffered']
    #allocation3 [shape = 's32[1]{0}', space=sflag, size = 0x4, scoped, tag = 'scoped memory for tpu_custom_call.1']
    #allocation4 [shape = 's32[1]{0}', space=sflag, size = 0x4, scoped, tag = 'scoped memory for tpu_custom_call.1']
    #allocation5 [shape = 'u8[16384]{0}', space=vmem, size = 0x4000, scoped, tag = 'input window, operand 1, single buffered']
    #allocation6 [shape = 's32[1]{0}', space=sflag, size = 0x4, scoped, tag = 'scoped memory for tpu_custom_call.1']
    #allocation7 [shape = 'u8[131072]{0}', space=vmem, size = 0x20000, scoped, tag = 'input window, operand 3, single buffered']
    #allocation8 [shape = 'u8[131072]{0}', space=vmem, size = 0x20000, scoped, tag = 'input window, operand 5, single buffered']
    #allocation9 [shape = 's32[1]{0}', space=sflag, size = 0x4, scoped, tag = 'scoped memory for tpu_custom_call.1']
    #allocation10 [shape = 'u8[65536]{0}', space=vmem, size = 0x10000, scoped, tag = 'input window, operand 7, single buffered']
    #allocation11 [shape = 'u8[8192]{0}', space=vmem, size = 0x2000, scoped, tag = 'output window, operand 0, single buffered']
    %14 = vsyncpa [#allocation3], 0
    %15 = vsyncpa [#allocation6], 0
    %16 = vsyncpa [#allocation9], 0
    %17 = vsyncpa [#allocation4], 0
    // Predicated region
    $region2: #{tpu_custom_call.1} parent=1 // pred_check
      _
    $region3: #{tpu_custom_call.1} parent=1 // pred_check_branch
      %19 = sbr.rel (0) target = $region5
    $region4: #{tpu_custom_call.1} parent=1 // pred_region
      %s21 = ssub.s32 256, 256
      %22 = vsyncadd [#allocation3], %s21
      %s23 = sshll.u32 [#allocation2], 4
      %s24 = int_to_ptr.vmem [resolvable:$true] %s23
      %29 = dma.hbm_to_vmem [thread:$0]  %s0, 256, %s24, [#allocation3], 128, 128, 8
    $region5: #{tpu_custom_call.1} parent=1 // pred_fallthru
      _
    // Predicated region
    $region6: #{tpu_custom_call.1} parent=1 // pred_check
      _
    $region7: #{tpu_custom_call.1} parent=1 // pred_check_branch
      %31 = sbr.rel (0) target = $region9
    $region8: #{tpu_custom_call.1} parent=1 // pred_region
      %s33 = ssub.s32 512, 512
      %34 = vsyncadd [#allocation6], %s33
      %s35 = sshll.u32 [#allocation5], 4
      %s36 = int_to_ptr.vmem [resolvable:$true] %s35
      %41 = dma.hbm_to_vmem [thread:$0]  %s1, 512, %s36, [#allocation6], 128, 128, 8
    $region9: #{tpu_custom_call.1} parent=1 // pred_fallthru
      _
    // Predicated region
    $region10: #{tpu_custom_call.1} parent=1 // pred_check
      _
    $region11: #{tpu_custom_call.1} parent=1 // pred_check_branch
      %43 = sbr.rel (0) target = $region13
    $region12: #{tpu_custom_call.1} parent=1 // pred_region
      _
    $region13: #{tpu_custom_call.1} parent=1 // pred_fallthru
      _
    // Predicated region
    $region14: #{tpu_custom_call.1} parent=1 // pred_check
      _
    $region15: #{tpu_custom_call.1} parent=1 // pred_check_branch
      %45 = sbr.rel (0) target = $region17
    $region16: #{tpu_custom_call.1} parent=1 // pred_region
      %s47 = ssub.s32 4096, 4096
      %48 = vsyncadd [#allocation6], %s47
      %s49 = sshll.u32 [#allocation7], 4
      %s50 = int_to_ptr.vmem [resolvable:$true] %s49
      %55 = dma.hbm_to_vmem [thread:$0]  %s3, 4096, %s50, [#allocation6], 256, 256, 16
    $region17: #{tpu_custom_call.1} parent=1 // pred_fallthru
      _
    // Predicated region
    $region18: #{tpu_custom_call.1} parent=1 // pred_check
      _
    $region19: #{tpu_custom_call.1} parent=1 // pred_check_branch
      %57 = sbr.rel (0) target = $region21
    $region20: #{tpu_custom_call.1} parent=1 // pred_region
      _
    $region21: #{tpu_custom_call.1} parent=1 // pred_fallthru
      _
    // Predicated region
    $region22: #{tpu_custom_call.1} parent=1 // pred_check
      _
    $region23: #{tpu_custom_call.1} parent=1 // pred_check_branch
      %59 = sbr.rel (0) target = $region25
    $region24: #{tpu_custom_call.1} parent=1 // pred_region
      %s61 = ssub.s32 4096, 4096
      %62 = vsyncadd [#allocation9], %s61
      %s63 = sshll.u32 [#allocation8], 4
      %s64 = int_to_ptr.vmem [resolvable:$true] %s63
      %69 = dma.hbm_to_vmem [thread:$0]  %s5, 4096, %s64, [#allocation9], 128, 128, 8
    $region25: #{tpu_custom_call.1} parent=1 // pred_fallthru
      _
    // Predicated region
    $region26: #{tpu_custom_call.1} parent=1 // pred_check
      _
    $region27: #{tpu_custom_call.1} parent=1 // pred_check_branch
      %71 = sbr.rel (0) target = $region29
    $region28: #{tpu_custom_call.1} parent=1 // pred_region
      _
    $region29: #{tpu_custom_call.1} parent=1 // pred_fallthru
      _
    // Predicated region
    $region30: #{tpu_custom_call.1} parent=1 // pred_check
      _
    $region31: #{tpu_custom_call.1} parent=1 // pred_check_branch
      %73 = sbr.rel (0) target = $region33
    $region32: #{tpu_custom_call.1} parent=1 // pred_region
      %s75 = ssub.s32 2048, 2048
      %76 = vsyncadd [#allocation9], %s75
      %s77 = sshll.u32 [#allocation10], 4
      %s78 = int_to_ptr.vmem [resolvable:$true] %s77
      %83 = dma.hbm_to_vmem [thread:$0]  %s7, 2048, %s78, [#allocation9], 128, 128, 8
    $region33: #{tpu_custom_call.1} parent=1 // pred_fallthru
      _
    // Predicated region
    $region34: #{tpu_custom_call.1} parent=1 // pred_check
      _
    $region35: #{tpu_custom_call.1} parent=1 // pred_check_branch
      %85 = sbr.rel (0) target = $region37
    $region36: #{tpu_custom_call.1} parent=1 // pred_region
      _
    $region37: #{tpu_custom_call.1} parent=1 // pred_fallthru
      _
    // Predicated region
    $region38: #{tpu_custom_call.1} parent=1 // pred_check
      _
    $region39: #{tpu_custom_call.1} parent=1 // pred_check_branch
      %87 = sbr.rel (0) target = $region41
    $region40: #{tpu_custom_call.1} parent=1 // pred_region
      %88 = dma.done [#allocation3], 256
    $region41: #{tpu_custom_call.1} parent=1 // pred_fallthru
      _
    // Predicated region
    $region42: #{tpu_custom_call.1} parent=1 // pred_check
      _
    $region43: #{tpu_custom_call.1} parent=1 // pred_check_branch
      %90 = sbr.rel (0) target = $region45
    $region44: #{tpu_custom_call.1} parent=1 // pred_region
      %91 = dma.done [#allocation6], 512
    $region45: #{tpu_custom_call.1} parent=1 // pred_fallthru
      _
    // Predicated region
    $region46: #{tpu_custom_call.1} parent=1 // pred_check
      _
    $region47: #{tpu_custom_call.1} parent=1 // pred_check_branch
      %93 = sbr.rel (0) target = $region49
    $region48: #{tpu_custom_call.1} parent=1 // pred_region
      %94 = dma.done [#allocation6], 4096
    $region49: #{tpu_custom_call.1} parent=1 // pred_fallthru
      _
    // Predicated region
    $region50: #{tpu_custom_call.1} parent=1 // pred_check
      _
    $region51: #{tpu_custom_call.1} parent=1 // pred_check_branch
      %96 = sbr.rel (0) target = $region53
    $region52: #{tpu_custom_call.1} parent=1 // pred_region
      %97 = dma.done [#allocation9], 4096
    $region53: #{tpu_custom_call.1} parent=1 // pred_fallthru
      _
    // Predicated region
    $region54: #{tpu_custom_call.1} parent=1 // pred_check
      _
    $region55: #{tpu_custom_call.1} parent=1 // pred_check_branch
      %99 = sbr.rel (0) target = $region57
    $region56: #{tpu_custom_call.1} parent=1 // pred_region
      %100 = dma.done [#allocation9], 2048
    $region57: #{tpu_custom_call.1} parent=1 // pred_fallthru
      _
    %v101 = vld [vmem:[#allocation2] sm:$0xff]
    %v102 = vld [vmem:[#allocation2 + $0x8] sm:$0xff]
    %v103 = vld [vmem:[#allocation5] sm:$0xff]
    %v104 = vld [vmem:[#allocation5 + $0x8] sm:$0xff]
    %v105 = vld [vmem:[#allocation5 + $0x10] sm:$0xff]
    %v106 = vld [vmem:[#allocation5 + $0x18] sm:$0xff]
    %v107 = vld [vmem:[%s2] sm:$0x1]
    %v109 = vlaneseq
    %v110 = vshrl.u32 %v109, 7
    %v111 = vsub.s32 0, %v110
    %v112 = vrot.slane %v107, %v111
    %vm114 = vcmask 261120
    %v116 = vsel %vm114, %v101, 0
    %v119 = vsel %vm114, %v102, 0
    %121 = vmatprep.subr.mxu0 0.0
    %122 = vmatpush1.msra.mxu0 %v103
    %123 = vmatprep.subr.mxu0 0.0
    %124 = vmatpush1.msra.mxu0 %v104
    %125 = vmatprep.subr.mxu0 0.0
    %126 = vmatpush1.msra.mxu0 %v105
    %127 = vmatprep.subr.mxu0 0.0
    %128 = vmatpush1.msra.mxu0 %v106
    %129 = vmatprep.subr.mxu0 0.0
    %130 = vmatpush1.msra.mxu0 0.0
    %131 = vmatprep.subr.mxu0 0.0
    %132 = vmatpush1.msra.mxu0 0.0
    %133 = vmatprep.subr.mxu0 0.0
    %134 = vmatpush1.msra.mxu0 0.0
    %135 = vmatprep.subr.mxu0 0.0
    %136 = vmatpush1.msra.mxu0 0.0
    %137 = vmatprep.subr.mxu0 0.0
    %138 = vmatpush1.msra.mxu0 0.0
    %139 = vmatprep.subr.mxu0 0.0
    %140 = vmatpush1.msra.mxu0 0.0
    %141 = vmatprep.subr.mxu0 0.0
    %142 = vmatpush1.msra.mxu0 0.0
    %143 = vmatprep.subr.mxu0 0.0
    %144 = vmatpush1.msra.mxu0 0.0
    %145 = vmatprep.subr.mxu0 0.0
    %146 = vmatpush1.msra.mxu0 0.0
    %147 = vmatprep.subr.mxu0 0.0
    %148 = vmatpush1.msra.mxu0 0.0
    %149 = vmatprep.subr.mxu0 0.0
    %150 = vmatpush1.msra.mxu0 0.0
    %151 = vmatprep.subr.mxu0 0.0
    %152 = vmatpush1.msra.mxu0 0.0
    %153 = vmatprep.subr.mxu0 0.0
    %154 = vmatpush1.msra.mxu0 0.0
    %155 = vmatprep.subr.mxu0 0.0
    %156 = vmatpush1.msra.mxu0 0.0
    %157 = vmatprep.subr.mxu0 0.0
    %158 = vmatpush1.msra.mxu0 0.0
    %159 = vmatprep.subr.mxu0 0.0
    %160 = vmatpush1.msra.mxu0 0.0
    %161 = vmatprep.subr.mxu0 0.0
    %162 = vmatpush1.msra.mxu0 0.0
    %163 = vmatprep.subr.mxu0 0.0
    %164 = vmatpush1.msra.mxu0 0.0
    %165 = vmatprep.subr.mxu0 0.0
    %166 = vmatpush1.msra.mxu0 0.0
    %167 = vmatprep.subr.mxu0 0.0
    %168 = vmatpush1.msra.mxu0 0.0
    %169 = vmatprep.subr.mxu0 0.0
    %170 = vmatpush1.msra.mxu0 0.0
    %171 = vmatprep.subr.mxu0 0.0
    %172 = vmatpush1.msra.mxu0 0.0
    %173 = vmatprep.subr.mxu0 0.0
    %174 = vmatpush1.msra.mxu0 0.0
    %175 = vmatprep.subr.mxu0 0.0
    %176 = vmatpush1.msra.mxu0 0.0
    %177 = vmatprep.subr.mxu0 0.0
    %178 = vmatpush1.msra.mxu0 0.0
    %179 = vmatprep.subr.mxu0 0.0
    %180 = vmatpush1.msra.mxu0 0.0
    %181 = vmatprep.subr.mxu0 0.0
    %182 = vmatpush1.msra.mxu0 0.0
    %183 = vmatprep.subr.mxu0 0.0
    %184 = vmatpush1.msra.mxu0 0.0
    %185 = vmatprep.mubr.f32.mxu0 0.0
    %186 = vmatmul.mubr.f32.gmra.mrb[0].mxu0 %v116
    %v187 = vpop.f32.mrb[0].mxu0
    %v188 = vadd.f32 %v112, %v187
    %v189 = vpop.f32.mrb[0].mxu0
    %190 = vmatprep.mubr.f32.mxu0 0.0
    %191 = vmatmul.mubr.f32.gmra.mrb[0].mxu0 %v119
    %v192 = vpop.f32.mrb[0].mxu0
    %v193 = vadd.f32 %v112, %v192
    %v194 = vpop.f32.mrb[0].mxu0
    %195 = vdwg.mxu0
    %v196 = vmax.f32 %v188, 0.0
    %v197 = vmax.f32 %v193, 0.0
    %v198 = vld [vmem:[#allocation7] sm:$0xff]
    %v199 = vld [vmem:[#allocation7 + $0x8] sm:$0xff]
    %v200 = vld [vmem:[#allocation7 + $0x10] sm:$0xff]
    %v201 = vld [vmem:[#allocation7 + $0x18] sm:$0xff]
    %v202 = vld [vmem:[#allocation7 + $0x20] sm:$0xff]
    %v203 = vld [vmem:[#allocation7 + $0x28] sm:$0xff]
    %v204 = vld [vmem:[#allocation7 + $0x30] sm:$0xff]
    %v205 = vld [vmem:[#allocation7 + $0x38] sm:$0xff]
    %v206 = vld [vmem:[#allocation7 + $0x40] sm:$0xff]
    %v207 = vld [vmem:[#allocation7 + $0x48] sm:$0xff]
    %v208 = vld [vmem:[#allocation7 + $0x50] sm:$0xff]
    %v209 = vld [vmem:[#allocation7 + $0x58] sm:$0xff]
    %v210 = vld [vmem:[#allocation7 + $0x60] sm:$0xff]
    %v211 = vld [vmem:[#allocation7 + $0x68] sm:$0xff]
    %v212 = vld [vmem:[#allocation7 + $0x70] sm:$0xff]
    %v213 = vld [vmem:[#allocation7 + $0x78] sm:$0xff]
    %v214 = vld [vmem:[#allocation7 + $0x80] sm:$0xff]
    %v215 = vld [vmem:[#allocation7 + $0x88] sm:$0xff]
    %v216 = vld [vmem:[#allocation7 + $0x90] sm:$0xff]
    %v217 = vld [vmem:[#allocation7 + $0x98] sm:$0xff]
    %v218 = vld [vmem:[#allocation7 + $0xa0] sm:$0xff]
    %v219 = vld [vmem:[#allocation7 + $0xa8] sm:$0xff]
    %v220 = vld [vmem:[#allocation7 + $0xb0] sm:$0xff]
    %v221 = vld [vmem:[#allocation7 + $0xb8] sm:$0xff]
    %v222 = vld [vmem:[#allocation7 + $0xc0] sm:$0xff]
    %v223 = vld [vmem:[#allocation7 + $0xc8] sm:$0xff]
    %v224 = vld [vmem:[#allocation7 + $0xd0] sm:$0xff]
    %v225 = vld [vmem:[#allocation7 + $0xd8] sm:$0xff]
    %v226 = vld [vmem:[#allocation7 + $0xe0] sm:$0xff]
    %v227 = vld [vmem:[#allocation7 + $0xe8] sm:$0xff]
    %v228 = vld [vmem:[#allocation7 + $0xf0] sm:$0xff]
    %v229 = vld [vmem:[#allocation7 + $0xf8] sm:$0xff]
    %v230 = vld [vmem:[%s4] sm:$0x3]
    %v232 = vlaneseq
    %v233 = vshrl.u32 %v232, 7
    %v234 = vsub.s32 0, %v233
    %v235 = vrot.slane %v230, %v234
    %v236 = vlaneseq
    %v237 = vshrl.u32 %v236, 7
    %v238 = vsub.s32 1, %v237
    %v239 = vrot.slane %v230, %v238
    %242 = vmatprep.subr.mxu0 %v199
    %243 = vmatpush1.msra.mxu0 %v198
    %244 = vmatprep.subr.mxu0 %v201
    %245 = vmatpush1.msra.mxu0 %v200
    %246 = vmatprep.subr.mxu0 %v203
    %247 = vmatpush1.msra.mxu0 %v202
    %248 = vmatprep.subr.mxu0 %v205
    %249 = vmatpush1.msra.mxu0 %v204
    %250 = vmatprep.subr.mxu0 %v207
    %251 = vmatpush1.msra.mxu0 %v206
    %252 = vmatprep.subr.mxu0 %v209
    %253 = vmatpush1.msra.mxu0 %v208
    %254 = vmatprep.subr.mxu0 %v211
    %255 = vmatpush1.msra.mxu0 %v210
    %256 = vmatprep.subr.mxu0 %v213
    %257 = vmatpush1.msra.mxu0 %v212
    %258 = vmatprep.subr.mxu0 %v215
    %259 = vmatpush1.msra.mxu0 %v214
    %260 = vmatprep.subr.mxu0 %v217
    %261 = vmatpush1.msra.mxu0 %v216
    %262 = vmatprep.subr.mxu0 %v219
    %263 = vmatpush1.msra.mxu0 %v218
    %264 = vmatprep.subr.mxu0 %v221
    %265 = vmatpush1.msra.mxu0 %v220
    %266 = vmatprep.subr.mxu0 %v223
    %267 = vmatpush1.msra.mxu0 %v222
    %268 = vmatprep.subr.mxu0 %v225
    %269 = vmatpush1.msra.mxu0 %v224
    %270 = vmatprep.subr.mxu0 %v227
    %271 = vmatpush1.msra.mxu0 %v226
    %272 = vmatprep.subr.mxu0 %v229
    %273 = vmatpush1.msra.mxu0 %v228
    %274 = vmatprep.subr.mxu0 0.0
    %275 = vmatpush1.msra.mxu0 0.0
    %276 = vmatprep.subr.mxu0 0.0
    %277 = vmatpush1.msra.mxu0 0.0
    %278 = vmatprep.subr.mxu0 0.0
    %279 = vmatpush1.msra.mxu0 0.0
    %280 = vmatprep.subr.mxu0 0.0
    %281 = vmatpush1.msra.mxu0 0.0
    %282 = vmatprep.subr.mxu0 0.0
    %283 = vmatpush1.msra.mxu0 0.0
    %284 = vmatprep.subr.mxu0 0.0
    %285 = vmatpush1.msra.mxu0 0.0
    %286 = vmatprep.subr.mxu0 0.0
    %287 = vmatpush1.msra.mxu0 0.0
    %288 = vmatprep.subr.mxu0 0.0
    %289 = vmatpush1.msra.mxu0 0.0
    %290 = vmatprep.subr.mxu0 0.0
    %291 = vmatpush1.msra.mxu0 0.0
    %292 = vmatprep.subr.mxu0 0.0
    %293 = vmatpush1.msra.mxu0 0.0
    %294 = vmatprep.subr.mxu0 0.0
    %295 = vmatpush1.msra.mxu0 0.0
    %296 = vmatprep.subr.mxu0 0.0
    %297 = vmatpush1.msra.mxu0 0.0
    %298 = vmatprep.subr.mxu0 0.0
    %299 = vmatpush1.msra.mxu0 0.0
    %300 = vmatprep.subr.mxu0 0.0
    %301 = vmatpush1.msra.mxu0 0.0
    %302 = vmatprep.subr.mxu0 0.0
    %303 = vmatpush1.msra.mxu0 0.0
    %304 = vmatprep.subr.mxu0 0.0
    %305 = vmatpush1.msra.mxu0 0.0
    %306 = vmatprep.mubr.f32.mxu0 0.0
    %307 = vmatmul.mubr.f32.gmra.mrb[0].mxu0 %v196
    %v308 = vpop.f32.mrb[0].mxu0
    %v309 = vadd.f32 %v235, %v308
    %v310 = vpop.f32.mrb[0].mxu0
    %v311 = vadd.f32 %v239, %v310
    %312 = vmatprep.mubr.f32.mxu0 0.0
    %313 = vmatmul.mubr.f32.gmra.mrb[0].mxu0 %v197
    %v314 = vpop.f32.mrb[0].mxu0
    %v315 = vadd.f32 %v235, %v314
    %v316 = vpop.f32.mrb[0].mxu0
    %v317 = vadd.f32 %v239, %v316
    %318 = vdwg.mxu0
    %v319 = vmax.f32 %v309, 0.0
    %v320 = vmax.f32 %v311, 0.0
    %v321 = vmax.f32 %v315, 0.0
    %v322 = vmax.f32 %v317, 0.0
    %v323 = vld [vmem:[#allocation8] sm:$0xff]
    %v324 = vld [vmem:[#allocation8 + $0x8] sm:$0xff]
    %v325 = vld [vmem:[#allocation8 + $0x10] sm:$0xff]
    %v326 = vld [vmem:[#allocation8 + $0x18] sm:$0xff]
    %v327 = vld [vmem:[#allocation8 + $0x20] sm:$0xff]
    %v328 = vld [vmem:[#allocation8 + $0x28] sm:$0xff]
    %v329 = vld [vmem:[#allocation8 + $0x30] sm:$0xff]
    %v330 = vld [vmem:[#allocation8 + $0x38] sm:$0xff]
    %v331 = vld [vmem:[#allocation8 + $0x40] sm:$0xff]
    %v332 = vld [vmem:[#allocation8 + $0x48] sm:$0xff]
    %v333 = vld [vmem:[#allocation8 + $0x50] sm:$0xff]
    %v334 = vld [vmem:[#allocation8 + $0x58] sm:$0xff]
    %v335 = vld [vmem:[#allocation8 + $0x60] sm:$0xff]
    %v336 = vld [vmem:[#allocation8 + $0x68] sm:$0xff]
    %v337 = vld [vmem:[#allocation8 + $0x70] sm:$0xff]
    %v338 = vld [vmem:[#allocation8 + $0x78] sm:$0xff]
    %v339 = vld [vmem:[#allocation8 + $0x80] sm:$0xff]
    %v340 = vld [vmem:[#allocation8 + $0x88] sm:$0xff]
    %v341 = vld [vmem:[#allocation8 + $0x90] sm:$0xff]
    %v342 = vld [vmem:[#allocation8 + $0x98] sm:$0xff]
    %v343 = vld [vmem:[#allocation8 + $0xa0] sm:$0xff]
    %v344 = vld [vmem:[#allocation8 + $0xa8] sm:$0xff]
    %v345 = vld [vmem:[#allocation8 + $0xb0] sm:$0xff]
    %v346 = vld [vmem:[#allocation8 + $0xb8] sm:$0xff]
    %v347 = vld [vmem:[#allocation8 + $0xc0] sm:$0xff]
    %v348 = vld [vmem:[#allocation8 + $0xc8] sm:$0xff]
    %v349 = vld [vmem:[#allocation8 + $0xd0] sm:$0xff]
    %v350 = vld [vmem:[#allocation8 + $0xd8] sm:$0xff]
    %v351 = vld [vmem:[#allocation8 + $0xe0] sm:$0xff]
    %v352 = vld [vmem:[#allocation8 + $0xe8] sm:$0xff]
    %v353 = vld [vmem:[#allocation8 + $0xf0] sm:$0xff]
    %v354 = vld [vmem:[#allocation8 + $0xf8] sm:$0xff]
    %v355 = vld [vmem:[%s6] sm:$0x1]
    %v357 = vlaneseq
    %v358 = vshrl.u32 %v357, 7
    %v359 = vsub.s32 0, %v358
    %v360 = vrot.slane %v355, %v359
    %362 = vmatprep.subr.mxu0 0.0
    %363 = vmatpush1.msra.mxu0 %v323
    %364 = vmatprep.subr.mxu0 0.0
    %365 = vmatpush1.msra.mxu0 %v324
    %366 = vmatprep.subr.mxu0 0.0
    %367 = vmatpush1.msra.mxu0 %v325
    %368 = vmatprep.subr.mxu0 0.0
    %369 = vmatpush1.msra.mxu0 %v326
    %370 = vmatprep.subr.mxu0 0.0
    %371 = vmatpush1.msra.mxu0 %v327
    %372 = vmatprep.subr.mxu0 0.0
    %373 = vmatpush1.msra.mxu0 %v328
    %374 = vmatprep.subr.mxu0 0.0
    %375 = vmatpush1.msra.mxu0 %v329
    %376 = vmatprep.subr.mxu0 0.0
    %377 = vmatpush1.msra.mxu0 %v330
    %378 = vmatprep.subr.mxu0 0.0
    %379 = vmatpush1.msra.mxu0 %v331
    %380 = vmatprep.subr.mxu0 0.0
    %381 = vmatpush1.msra.mxu0 %v332
    %382 = vmatprep.subr.mxu0 0.0
    %383 = vmatpush1.msra.mxu0 %v333
    %384 = vmatprep.subr.mxu0 0.0
    %385 = vmatpush1.msra.mxu0 %v334
    %386 = vmatprep.subr.mxu0 0.0
    %387 = vmatpush1.msra.mxu0 %v335
    %388 = vmatprep.subr.mxu0 0.0
    %389 = vmatpush1.msra.mxu0 %v336
    %390 = vmatprep.subr.mxu0 0.0
    %391 = vmatpush1.msra.mxu0 %v337
    %392 = vmatprep.subr.mxu0 0.0
    %393 = vmatpush1.msra.mxu0 %v338
    %394 = vmatprep.subr.mxu0 0.0
    %395 = vmatpush1.msra.mxu0 %v339
    %396 = vmatprep.subr.mxu0 0.0
    %397 = vmatpush1.msra.mxu0 %v340
    %398 = vmatprep.subr.mxu0 0.0
    %399 = vmatpush1.msra.mxu0 %v341
    %400 = vmatprep.subr.mxu0 0.0
    %401 = vmatpush1.msra.mxu0 %v342
    %402 = vmatprep.subr.mxu0 0.0
    %403 = vmatpush1.msra.mxu0 %v343
    %404 = vmatprep.subr.mxu0 0.0
    %405 = vmatpush1.msra.mxu0 %v344
    %406 = vmatprep.subr.mxu0 0.0
    %407 = vmatpush1.msra.mxu0 %v345
    %408 = vmatprep.subr.mxu0 0.0
    %409 = vmatpush1.msra.mxu0 %v346
    %410 = vmatprep.subr.mxu0 0.0
    %411 = vmatpush1.msra.mxu0 %v347
    %412 = vmatprep.subr.mxu0 0.0
    %413 = vmatpush1.msra.mxu0 %v348
    %414 = vmatprep.subr.mxu0 0.0
    %415 = vmatpush1.msra.mxu0 %v349
    %416 = vmatprep.subr.mxu0 0.0
    %417 = vmatpush1.msra.mxu0 %v350
    %418 = vmatprep.subr.mxu0 0.0
    %419 = vmatpush1.msra.mxu0 %v351
    %420 = vmatprep.subr.mxu0 0.0
    %421 = vmatpush1.msra.mxu0 %v352
    %422 = vmatprep.subr.mxu0 0.0
    %423 = vmatpush1.msra.mxu0 %v353
    %424 = vmatprep.subr.mxu0 0.0
    %425 = vmatpush1.msra.mxu0 %v354
    %426 = vmatprep.mubr.f32.mxu0 %v320
    %427 = vmatmul.mubr.f32.gmra.mrb[0].mxu0 %v319
    %v428 = vpop.f32.mrb[0].mxu0
    %v429 = vadd.f32 %v360, %v428
    %v430 = vpop.f32.mrb[0].mxu0
    %431 = vmatprep.mubr.f32.mxu0 %v322
    %432 = vmatmul.mubr.f32.gmra.mrb[0].mxu0 %v321
    %v433 = vpop.f32.mrb[0].mxu0
    %v434 = vadd.f32 %v360, %v433
    %v435 = vpop.f32.mrb[0].mxu0
    %436 = vdwg.mxu0
    %v437 = vmax.f32 %v429, 0.0
    %v438 = vmax.f32 %v434, 0.0
    %v439 = vld [vmem:[#allocation10] sm:$0xff]
    %v440 = vld [vmem:[#allocation10 + $0x8] sm:$0xff]
    %v441 = vld [vmem:[#allocation10 + $0x10] sm:$0xff]
    %v442 = vld [vmem:[#allocation10 + $0x18] sm:$0xff]
    %v443 = vld [vmem:[#allocation10 + $0x20] sm:$0xff]
    %v444 = vld [vmem:[#allocation10 + $0x28] sm:$0xff]
    %v445 = vld [vmem:[#allocation10 + $0x30] sm:$0xff]
    %v446 = vld [vmem:[#allocation10 + $0x38] sm:$0xff]
    %v447 = vld [vmem:[#allocation10 + $0x40] sm:$0xff]
    %v448 = vld [vmem:[#allocation10 + $0x48] sm:$0xff]
    %v449 = vld [vmem:[#allocation10 + $0x50] sm:$0xff]
    %v450 = vld [vmem:[#allocation10 + $0x58] sm:$0xff]
    %v451 = vld [vmem:[#allocation10 + $0x60] sm:$0xff]
    %v452 = vld [vmem:[#allocation10 + $0x68] sm:$0xff]
    %v453 = vld [vmem:[#allocation10 + $0x70] sm:$0xff]
    %v454 = vld [vmem:[#allocation10 + $0x78] sm:$0xff]
    %v455 = vld [vmem:[%s8] sm:$0x1]
    %v457 = vlaneseq
    %v458 = vshrl.u32 %v457, 7
    %v459 = vsub.s32 0, %v458
    %v460 = vrot.slane %v455, %v459
    %462 = vmatprep.subr.mxu0 0.0
    %463 = vmatpush1.msra.mxu0 %v439
    %464 = vmatprep.subr.mxu0 0.0
    %465 = vmatpush1.msra.mxu0 %v440
    %466 = vmatprep.subr.mxu0 0.0
    %467 = vmatpush1.msra.mxu0 %v441
    %468 = vmatprep.subr.mxu0 0.0
    %469 = vmatpush1.msra.mxu0 %v442
    %470 = vmatprep.subr.mxu0 0.0
    %471 = vmatpush1.msra.mxu0 %v443
    %472 = vmatprep.subr.mxu0 0.0
    %473 = vmatpush1.msra.mxu0 %v444
    %474 = vmatprep.subr.mxu0 0.0
    %475 = vmatpush1.msra.mxu0 %v445
    %476 = vmatprep.subr.mxu0 0.0
    %477 = vmatpush1.msra.mxu0 %v446
    %478 = vmatprep.subr.mxu0 0.0
    %479 = vmatpush1.msra.mxu0 %v447
    %480 = vmatprep.subr.mxu0 0.0
    %481 = vmatpush1.msra.mxu0 %v448
    %482 = vmatprep.subr.mxu0 0.0
    %483 = vmatpush1.msra.mxu0 %v449
    %484 = vmatprep.subr.mxu0 0.0
    %485 = vmatpush1.msra.mxu0 %v450
    %486 = vmatprep.subr.mxu0 0.0
    %487 = vmatpush1.msra.mxu0 %v451
    %488 = vmatprep.subr.mxu0 0.0
    %489 = vmatpush1.msra.mxu0 %v452
    %490 = vmatprep.subr.mxu0 0.0
    %491 = vmatpush1.msra.mxu0 %v453
    %492 = vmatprep.subr.mxu0 0.0
    %493 = vmatpush1.msra.mxu0 %v454
    %494 = vmatprep.subr.mxu0 0.0
    %495 = vmatpush1.msra.mxu0 0.0
    %496 = vmatprep.subr.mxu0 0.0
    %497 = vmatpush1.msra.mxu0 0.0
    %498 = vmatprep.subr.mxu0 0.0
    %499 = vmatpush1.msra.mxu0 0.0
    %500 = vmatprep.subr.mxu0 0.0
    %501 = vmatpush1.msra.mxu0 0.0
    %502 = vmatprep.subr.mxu0 0.0
    %503 = vmatpush1.msra.mxu0 0.0
    %504 = vmatprep.subr.mxu0 0.0
    %505 = vmatpush1.msra.mxu0 0.0
    %506 = vmatprep.subr.mxu0 0.0
    %507 = vmatpush1.msra.mxu0 0.0
    %508 = vmatprep.subr.mxu0 0.0
    %509 = vmatpush1.msra.mxu0 0.0
    %510 = vmatprep.subr.mxu0 0.0
    %511 = vmatpush1.msra.mxu0 0.0
    %512 = vmatprep.subr.mxu0 0.0
    %513 = vmatpush1.msra.mxu0 0.0
    %514 = vmatprep.subr.mxu0 0.0
    %515 = vmatpush1.msra.mxu0 0.0
    %516 = vmatprep.subr.mxu0 0.0
    %517 = vmatpush1.msra.mxu0 0.0
    %518 = vmatprep.subr.mxu0 0.0
    %519 = vmatpush1.msra.mxu0 0.0
    %520 = vmatprep.subr.mxu0 0.0
    %521 = vmatpush1.msra.mxu0 0.0
    %522 = vmatprep.subr.mxu0 0.0
    %523 = vmatpush1.msra.mxu0 0.0
    %524 = vmatprep.subr.mxu0 0.0
    %525 = vmatpush1.msra.mxu0 0.0
    %526 = vmatprep.mubr.f32.mxu0 0.0
    %527 = vmatmul.mubr.f32.gmra.mrb[0].mxu0 %v437
    %v528 = vpop.f32.mrb[0].mxu0
    %v529 = vadd.f32 %v460, %v528
    %v530 = vpop.f32.mrb[0].mxu0
    %531 = vmatprep.mubr.f32.mxu0 0.0
    %532 = vmatmul.mubr.f32.gmra.mrb[0].mxu0 %v438
    %v533 = vpop.f32.mrb[0].mxu0
    %v534 = vadd.f32 %v460, %v533
    %v535 = vpop.f32.mrb[0].mxu0
    %536 = vdwg.mxu0
    %537 = vst [vmem:[#allocation11] sm:$0xff] %v529
    %538 = vst [vmem:[#allocation11 + $0x8] sm:$0xff] %v534
    // Predicated region
    $region58: #{tpu_custom_call.1} parent=1 // pred_check
      _
    $region59: #{tpu_custom_call.1} parent=1 // pred_check_branch
      %540 = sbr.rel (0) target = $region61
    $region60: #{tpu_custom_call.1} parent=1 // pred_region
      %s542 = ssub.s32 256, 256
      %543 = vsyncadd [#allocation4], %s542
      %s544 = sshll.u32 [#allocation11], 4
      %s545 = int_to_ptr.vmem [resolvable:$true] %s544
      %550 = dma.vmem_to_hbm [thread:$0]  %s545, 256, %s9, [#allocation4], 128, 128, 8
    $region61: #{tpu_custom_call.1} parent=1 // pred_fallthru
      _
    // Predicated region
    $region62: #{tpu_custom_call.1} parent=1 // pred_check
      _
    $region63: #{tpu_custom_call.1} parent=1 // pred_check_branch
      %552 = sbr.rel (0) target = $region65
    $region64: #{tpu_custom_call.1} parent=1 // pred_region
      %553 = dma.done [#allocation4], 256
    $region65: #{tpu_custom_call.1} parent=1 // pred_fallthru
      _
    %554 = vsyncpa [#allocation3], 1
    %555 = vsyncpa [#allocation6], 1
    %556 = vsyncpa [#allocation9], 1
    %557 = vsyncpa [#allocation4], 1

</llo_original>
